<compile_context>
chip_gen: v5e
topology: v5e:2x2
jax: 0.10.0
libtpu: 0.0.40
codegen_flags: <defaults>
</compile_context>

<pallas_src>
import functools

import jax
import jax.numpy as jnp
from jax.experimental import pallas as pl
from jax.experimental.pallas import tpu as pltpu

LN_EPS = 1e-5                       # nn.LayerNorm default eps
_VMEM_LIMIT = 32 * 1024 * 1024      # explicit scoped-VMEM limit (v5e..v7x safe)
_RESIDENT_BYTES_MAX = 8 * 1024 * 1024   # keep XW1/HW2 VMEM-resident below this


# --------------------------------------------------------------------------
# helpers
# --------------------------------------------------------------------------
def _round_up(v, m):
    return (v + m - 1) // m * m


def _pick_tile(n, candidates):
    """Largest candidate that divides n (falls back to n itself)."""
    for c in candidates:
        if n % c == 0:
            return c
    return n


def _pad_and_tiles(n):
    """Padded node count and (row-tile TM, neighbour-tile TK)."""
    if n >= 2048:
        # Large graphs: 1-2 MiB A tiles amortize per-grid-step overhead;
        # TM=512 keeps n_row >= 4 so the row axis shards across v7x cores.
        np_ = _round_up(n, 1024)
        tk = 2048 if np_ % 2048 == 0 else 1024
        return np_, 512, tk
    # Small / medium graphs: lane-dense neighbour axis, TM <= Np/2 so the
    # "parallel" row axis has at least 2 tiles (megacore), few k-steps.
    np_ = _round_up(n, 128)
    tm = _pick_tile(np_, [t for t in (512, 256, 128, 64) if t <= max(np_ // 2, 64)])
    tk = _pick_tile(np_, (2048, 1024, 512, 256, 128))
    return np_, tm, tk


def _pad2(a, shape, dtype=jnp.float32):
    out = jnp.zeros(shape, dtype)
    return out.at[: a.shape[0], : a.shape[1]].set(a.astype(dtype))


# --------------------------------------------------------------------------
# kernel 1: HW2 = LayerNorm(relu(A @ XW1 + b1)) @ W2     (bf16 output)
# --------------------------------------------------------------------------
def _gcn_layer1_kernel(a_ref, xw_ref, b1_ref, g1_ref, be1_ref, w2_ref,
                       hw2_ref, acc_ref, *, hidden_dim, n_valid, tm, tk,
                       resident_xw):
    i = pl.program_id(0)
    k = pl.program_id(1)

    @pl.when(k == 0)
    def _():
        acc_ref[...] = jnp.zeros_like(acc_ref)

    # XW1 was hoisted out of the k-loop: either VMEM-resident (slice rows) or
    # streamed per k-step as a (TK, Hp) bf16 block.
    if resident_xw:
        xw_k = xw_ref[pl.ds(pl.multiple_of(k * tk, tk), tk), :]
    else:
        xw_k = xw_ref[...]
    acc_ref[...] += jnp.dot(a_ref[...], xw_k, preferred_element_type=jnp.float32)

    @pl.when(k == pl.num_programs(1) - 1)
    def _():
        h = jnp.maximum(acc_ref[...] + b1_ref[...], 0.0)
        # TODO(synk): dropout omitted (training=False / inference semantics).
        # LayerNorm over the *logical* hidden_dim.  Padded lanes of h are
        # exactly zero (zero-padded W1/b1), so sum(h) and sum(h*h) already
        # ignore them; padded gamma/beta are zero -> padded lanes stay zero.
        inv_h = 1.0 / hidden_dim
        mean = jnp.sum(h, axis=-1, keepdims=True) * inv_h
        var = jnp.maximum(
            jnp.sum(h * h, axis=-1, keepdims=True) * inv_h - mean * mean, 0.0)
        h_ln = ((h - mean) * jax.lax.rsqrt(var + LN_EPS)
                * g1_ref[...] + be1_ref[...])
        # Zero padded node rows so the carried activation is clean even if
        # downstream padding assumptions ever change.
        row = i * tm + jax.lax.broadcasted_iota(jnp.int32, h_ln.shape, 0)
        h_ln = jnp.where(row < n_valid, h_ln, 0.0)
        # Fuse the layer-2 feature transform here: output is bf16 HW2, so the
        # second kernel is a pure A @ HW2 stream.
        hw2_ref[...] = jnp.dot(h_ln.astype(jnp.bfloat16), w2_ref[...],
                               preferred_element_type=jnp.float32
                               ).astype(jnp.bfloat16)


# --------------------------------------------------------------------------
# kernel 2: emb = A @ HW2 + b2 ;
#           logp = log_softmax(relu(emb) @ Wp1 + bp1) @ Wp2 + bp2)
# --------------------------------------------------------------------------
def _gcn_layer2_kernel(a_ref, hw_ref, b2_ref, wp1_ref, bp1_ref, wp2_ref,
                       bp2_ref, emb_ref, logp_ref, acc_ref, *, out_dim, tk,
                       resident_hw):
    k = pl.program_id(1)

    @pl.when(k == 0)
    def _():
        acc_ref[...] = jnp.zeros_like(acc_ref)

    if resident_hw:
        hw_k = hw_ref[pl.ds(pl.multiple_of(k * tk, tk), tk), :]
    else:
        hw_k = hw_ref[...]
    acc_ref[...] += jnp.dot(a_ref[...], hw_k, preferred_element_type=jnp.float32)

    @pl.when(k == pl.num_programs(1) - 1)
    def _():
        h2 = acc_ref[...] + b2_ref[...]
        emb_ref[...] = h2                       # emb = last conv output (pre-relu)

        r = jnp.maximum(h2, 0.0).astype(jnp.bfloat16)
        # TODO(synk): dropout omitted (training=False / inference semantics).
        y = (jnp.dot(r, wp1_ref[...], preferred_element_type=jnp.float32)
             + bp1_ref[...])
        y = (jnp.dot(y.astype(jnp.bfloat16), wp2_ref[...],
                     preferred_element_type=jnp.float32) + bp2_ref[...])

        # log_softmax over the *logical* output_dim; mask padded lanes.
        lane = jax.lax.broadcasted_iota(jnp.int32, y.shape, 1)
        y = jnp.where(lane < out_dim, y, -1e30)
        m = jnp.max(y, axis=-1, keepdims=True)
        z = y - m
        lse = jnp.log(jnp.sum(jnp.exp(z), axis=-1, keepdims=True))
        logp_ref[...] = z - lse


# --------------------------------------------------------------------------
# wrapper
# --------------------------------------------------------------------------
def gnn_stack_forward(a_norm, x, params):
    N, _ = x.shape
    H = params["w1"].shape[1]
    O = params["wp2"].shape[1]

    Np, TM, TK = _pad_and_tiles(N)
    Hp = _round_up(H, 128)
    Op = _round_up(O, 128)
    n_row, n_col = Np // TM, Np // TK

    # Keep the hoisted activation matrices VMEM-resident only while a single
    # buffer fits the (v7x-aware) budget; otherwise stream them per k-step.
    resident = (Np * Hp * 2) <= _RESIDENT_BYTES_MAX

    # Hoisted feature transform: XW1 = x @ W1 computed ONCE (f32 matmul),
    # stored bf16 so both MXU operands of the A matmul are native bf16.
    xw1 = jnp.dot(x, params["w1"], precision=jax.lax.Precision.HIGHEST)
    xw1_p = _pad2(xw1, (Np, Hp), jnp.bfloat16)

    # Zero-padding keeps the math exact (see kernel comments). A is bf16 to
    # halve the dominant HBM stream; biases / LN params stay f32.
    a_p = _pad2(a_norm, (Np, Np), jnp.bfloat16)
    b1_p = _pad2(params["b1"], (1, Hp))
    g1_p = _pad2(params["g1"], (1, Hp))
    be1_p = _pad2(params["be1"], (1, Hp))
    w2_p = _pad2(params["w2"], (Hp, Hp), jnp.bfloat16)
    b2_p = _pad2(params["b2"], (1, Hp))
    wp1_p = _pad2(params["wp1"], (Hp, Hp), jnp.bfloat16)
    bp1_p = _pad2(params["bp1"], (1, Hp))
    wp2_p = _pad2(params["wp2"], (Hp, Op), jnp.bfloat16)
    bp2_p = _pad2(params["bp2"], (1, Op))

    compiler_params = pltpu.CompilerParams(
        dimension_semantics=("parallel", "arbitrary"),
        vmem_limit_bytes=_VMEM_LIMIT,
    )

    # BlockSpec for the hoisted activations (XW1 in layer 1, HW2 in layer 2).
    if resident:
        act_spec = pl.BlockSpec((Np, Hp), lambda i, k: (0, 0))   # VMEM-resident
    else:
        act_spec = pl.BlockSpec((TK, Hp), lambda i, k: (k, 0))   # streamed per k

    act_stream_bytes = (1 if resident else n_row) * Np * Hp * 2

    # ---- layer 1 -----------------------------------------------------------
    cost1 = pl.CostEstimate(
        flops=int(2 * Np * Np * Hp + 2 * Np * Hp * Hp),
        transcendentals=int(Np),
        bytes_accessed=int(Np * Np * 2 + act_stream_bytes + Np * Hp * 2),
    )
    hw2 = pl.pallas_call(
        functools.partial(_gcn_layer1_kernel, hidden_dim=H, n_valid=N,
                          tm=TM, tk=TK, resident_xw=resident),
        grid_spec=pltpu.PrefetchScalarGridSpec(
            num_scalar_prefetch=0,
            grid=(n_row, n_col),
            in_specs=[
                pl.BlockSpec((TM, TK), lambda i, k: (i, k)),   # A tile (streamed)
                act_spec,                                      # XW1 (bf16)
                pl.BlockSpec((1, Hp), lambda i, k: (0, 0)),    # b1
                pl.BlockSpec((1, Hp), lambda i, k: (0, 0)),    # LayerNorm gamma
                pl.BlockSpec((1, Hp), lambda i, k: (0, 0)),    # LayerNorm beta
                pl.BlockSpec((Hp, Hp), lambda i, k: (0, 0)),   # W2 (bf16)
            ],
            out_specs=pl.BlockSpec((TM, Hp), lambda i, k: (i, 0)),
            scratch_shapes=[pltpu.VMEM((TM, Hp), jnp.float32)],
        ),
        out_shape=jax.ShapeDtypeStruct((Np, Hp), jnp.bfloat16),
        compiler_params=compiler_params,
        cost_estimate=cost1,
    )(a_p, xw1_p, b1_p, g1_p, be1_p, w2_p)

    # ---- layer 2 + post_mp + log_softmax -----------------------------------
    cost2 = pl.CostEstimate(
        flops=int(2 * Np * Np * Hp + 2 * Np * Hp * Hp + 2 * Np * Hp * Op),
        transcendentals=int(Np * Op + Np),
        bytes_accessed=int(Np * Np * 2 + act_stream_bytes
                           + Np * Hp * 4 + Np * Op * 4),
    )
    emb_p, logp_p = pl.pallas_call(
        functools.partial(_gcn_layer2_kernel, out_dim=O, tk=TK,
                          resident_hw=resident),
        grid_spec=pltpu.PrefetchScalarGridSpec(
            num_scalar_prefetch=0,
            grid=(n_row, n_col),
            in_specs=[
                pl.BlockSpec((TM, TK), lambda i, k: (i, k)),   # A tile (streamed)
                act_spec,                                      # HW2 (bf16)
                pl.BlockSpec((1, Hp), lambda i, k: (0, 0)),    # b2
                pl.BlockSpec((Hp, Hp), lambda i, k: (0, 0)),   # post_mp W1 (bf16)
                pl.BlockSpec((1, Hp), lambda i, k: (0, 0)),    # post_mp b1
                pl.BlockSpec((Hp, Op), lambda i, k: (0, 0)),   # post_mp W2 (bf16)
                pl.BlockSpec((1, Op), lambda i, k: (0, 0)),    # post_mp b2
            ],
            out_specs=(
                pl.BlockSpec((TM, Hp), lambda i, k: (i, 0)),   # emb (lane-dense)
                pl.BlockSpec((TM, Op), lambda i, k: (i, 0)),   # logp (lane-dense)
            ),
            scratch_shapes=[pltpu.VMEM((TM, Hp), jnp.float32)],
        ),
        out_shape=(
            jax.ShapeDtypeStruct((Np, Hp), jnp.float32),
            jax.ShapeDtypeStruct((Np, Op), jnp.float32),
        ),
        compiler_params=compiler_params,
        cost_estimate=cost2,
    )(a_p, hw2, b2_p, wp1_p, bp1_p, wp2_p, bp2_p)

    return emb_p[:N, :H], logp_p[:N, :O]


# --------------------------------------------------------------------------
# pure-JAX reference (f32)
# --------------------------------------------------------------------------
def reference_forward(a_norm, x, p):
    h1 = a_norm @ (x @ p["w1"]) + p["b1"]
    h = jnp.maximum(h1, 0.0)
    mean = jnp.mean(h, axis=-1, keepdims=True)
    var = jnp.mean((h - mean) ** 2, axis=-1, keepdims=True)
    h = (h - mean) / jnp.sqrt(var + LN_EPS) * p["g1"] + p["be1"]
    h2 = a_norm @ (h @ p["w2"]) + p["b2"]
    emb = h2
    h = jnp.maximum(h2, 0.0)
    y = (h @ p["wp1"] + p["bp1"]) @ p["wp2"] + p["bp2"]
    return emb, jax.nn.log_softmax(y, axis=1)


if __name__ == "__main__":
    num_nodes, input_dim, hidden_dim, output_dim = 32, 16, 32, 16
    num_edges = 64

    key = jax.random.PRNGKey(0)
    k_x, k_e, k_w1, k_w2, k_wp1, k_wp2 = jax.random.split(key, 6)

    # --- synthetic graph data (data.x, data.edge_index) ---
    x = jax.random.normal(k_x, (num_nodes, input_dim), dtype=jnp.float32)
    edge_index = jax.random.randint(k_e, (2, num_edges), 0, num_nodes)

    # --- dense symmetric GCN normalization:  D^-1/2 (A + I) D^-1/2 ---
    A = jnp.zeros((num_nodes, num_nodes), jnp.float32)
    A = A.at[edge_index[0], edge_index[1]].set(1.0)
    A = jnp.maximum(A, A.T)                                   # undirected
    eye = jnp.eye(num_nodes, dtype=jnp.float32)
    A_hat = A * (1.0 - eye) + eye                             # add self loops
    deg = jnp.sum(A_hat, axis=1)
    d_inv_sqrt = 1.0 / jnp.sqrt(deg)
    a_norm = d_inv_sqrt[:, None] * A_hat * d_inv_sqrt[None, :]

    # --- deterministic parameter init (shapes from __init__) ---
    def glorot(k, shape):
        lim = jnp.sqrt(6.0 / (shape[0] + shape[1]))
        return jax.random.uniform(k, shape, jnp.float32, -lim, lim)

    params = {
        "w1": glorot(k_w1, (input_dim, hidden_dim)),
        "b1": jnp.zeros((1, hidden_dim), jnp.float32),
        "g1": jnp.ones((1, hidden_dim), jnp.float32),      # LayerNorm weight
        "be1": jnp.zeros((1, hidden_dim), jnp.float32),    # LayerNorm bias
        "w2": glorot(k_w2, (hidden_dim, hidden_dim)),
        "b2": jnp.zeros((1, hidden_dim), jnp.float32),
        "wp1": glorot(k_wp1, (hidden_dim, hidden_dim)),
        "bp1": jnp.full((1, hidden_dim), 0.01, jnp.float32),
        "wp2": glorot(k_wp2, (hidden_dim, output_dim)),
        "bp2": jnp.full((1, output_dim), 0.01, jnp.float32),
    }

    emb, logp = gnn_stack_forward(a_norm, x, params)
    jax.block_until_ready((emb, logp))

    # Reference: f32 math, but with the same bf16-rounded adjacency the kernel
    # streams, so only the in-kernel bf16 MXU rounding remains as a delta.
    a_norm_bf16 = a_norm.astype(jnp.bfloat16).astype(jnp.float32)
    emb_ref, logp_ref = reference_forward(a_norm_bf16, x, params)

    assert jnp.allclose(emb, emb_ref, atol=3e-2, rtol=3e-2)
    assert jnp.allclose(logp, logp_ref, atol=3e-2, rtol=3e-2)

    print("KERNEL_OK")
</pallas_src>

<mosaic_0001>
module attributes {stable_mosaic.version = 11 : i64} {
  func.func @_gcn_layer1_kernel(%arg0: i32, %arg1: i32, %arg2: memref<64x128xbf16, #tpu.memory_space<vmem>>, %arg3: memref<128x128xbf16, #tpu.memory_space<vmem>>, %arg4: memref<1x128xf32, #tpu.memory_space<vmem>>, %arg5: memref<1x128xf32, #tpu.memory_space<vmem>>, %arg6: memref<1x128xf32, #tpu.memory_space<vmem>>, %arg7: memref<128x128xbf16, #tpu.memory_space<vmem>>, %arg8: memref<64x128xbf16, #tpu.memory_space<vmem>>, %arg9: memref<64x128xf32, #tpu.memory_space<vmem>>) attributes {dimension_semantics = [#tpu.dimension_semantics<parallel>, #tpu.dimension_semantics<arbitrary>], iteration_bounds = array<i64: 2, 1>, scalar_prefetch = 0 : i64, scratch_operands = 1 : i64, tpu.core_type = #tpu.core_type<tc>, window_params = [{transform_indices = @transform_0, window_bounds = array<i64: 64, 128>}, {pipeline_mode = #tpu.pipeline_mode<synchronous>, transform_indices = @transform_1, window_bounds = array<i64: 128, 128>}, {pipeline_mode = #tpu.pipeline_mode<synchronous>, transform_indices = @transform_2, window_bounds = array<i64: 1, 128>}, {pipeline_mode = #tpu.pipeline_mode<synchronous>, transform_indices = @transform_3, window_bounds = array<i64: 1, 128>}, {pipeline_mode = #tpu.pipeline_mode<synchronous>, transform_indices = @transform_4, window_bounds = array<i64: 1, 128>}, {pipeline_mode = #tpu.pipeline_mode<synchronous>, transform_indices = @transform_5, window_bounds = array<i64: 128, 128>}, {transform_indices = @transform_6, window_bounds = array<i64: 64, 128>}]} {
    %c0_i32 = arith.constant 0 : i32
    %0 = arith.cmpi eq, %arg1, %c0_i32 : i32
    %1 = arith.extui %0 : i1 to i32
    %c0_i32_0 = arith.constant 0 : i32
    %2 = arith.cmpi ne, %1, %c0_i32_0 : i32
    scf.if %2 {
      %cst_9 = arith.constant 0.000000e+00 : f32
      %15 = vector.broadcast %cst_9 : f32 to vector<64x128xf32>
      %c0_10 = arith.constant 0 : index
      %c0_11 = arith.constant 0 : index
      %16 = vector.load %arg9[%c0_10, %c0_11] : memref<64x128xf32, #tpu.memory_space<vmem>>, vector<64x128xf32>
      tpu.vector_store %arg9[%c0_10, %c0_11], %15 {strides = array<i32>} : memref<64x128xf32, #tpu.memory_space<vmem>>, vector<64x128xf32>,
    } else {
    }
    %c128_i32 = arith.constant 128 : i32
    %3 = arith.muli %arg1, %c128_i32 : i32
    %4 = tpu.assume_multiple %3, 128 : i32
    %5 = arith.index_cast %4 : i32 to index
    %c0 = arith.constant 0 : index
    %6 = vector.load %arg3[%5, %c0] : memref<128x128xbf16, #tpu.memory_space<vmem>>, vector<128x128xbf16>
    %c0_1 = arith.constant 0 : index
    %c0_2 = arith.constant 0 : index
    %7 = vector.load %arg9[%c0_1, %c0_2] : memref<64x128xf32, #tpu.memory_space<vmem>>, vector<64x128xf32>
    %c0_3 = arith.constant 0 : index
    %c0_4 = arith.constant 0 : index
    %8 = vector.load %arg2[%c0_3, %c0_4] : memref<64x128xbf16, #tpu.memory_space<vmem>>, vector<64x128xbf16>
    %cst = arith.constant dense<0.000000e+00> : vector<64x128xf32>
    %9 = tpu.matmul %8, %6, %cst {dimension_numbers = #tpu.dot_dimension_numbers<[1], [0], [0], [1], [0, 0, 1, 1], [], []>} : vector<64x128xbf16>, vector<128x128xbf16>, vector<64x128xf32> -> vector<64x128xf32>
    %10 = arith.addf %7, %9 : vector<64x128xf32>
    %c0_5 = arith.constant 0 : index
    %c0_6 = arith.constant 0 : index
    %11 = vector.load %arg9[%c0_5, %c0_6] : memref<64x128xf32, #tpu.memory_space<vmem>>, vector<64x128xf32>
    tpu.vector_store %arg9[%c0_5, %c0_6], %10 {strides = array<i32>} : memref<64x128xf32, #tpu.memory_space<vmem>>, vector<64x128xf32>,
    %c0_i32_7 = arith.constant 0 : i32
    %12 = arith.cmpi eq, %arg1, %c0_i32_7 : i32
    %13 = arith.extui %12 : i1 to i32
    %c0_i32_8 = arith.constant 0 : i32
    %14 = arith.cmpi ne, %13, %c0_i32_8 : i32
    scf.if %14 {
      %c0_9 = arith.constant 0 : index
      %c0_10 = arith.constant 0 : index
      %15 = vector.load %arg9[%c0_9, %c0_10] : memref<64x128xf32, #tpu.memory_space<vmem>>, vector<64x128xf32>
      %c0_11 = arith.constant 0 : index
      %c0_12 = arith.constant 0 : index
      %16 = vector.load %arg4[%c0_11, %c0_12] : memref<1x128xf32, #tpu.memory_space<vmem>>, vector<1x128xf32>
      %17 = vector.broadcast %16 : vector<1x128xf32> to vector<64x128xf32>
      %18 = arith.addf %15, %17 : vector<64x128xf32>
      %cst_13 = arith.constant 0.000000e+00 : f32
      %19 = vector.broadcast %cst_13 : f32 to vector<64x128xf32>
      %20 = arith.maximumf %18, %19 : vector<64x128xf32>
      %cst_14 = arith.constant dense<0.000000e+00> : vector<64xf32>
      %21 = vector.multi_reduction <add>, %20, %cst_14 [1] : vector<64x128xf32> to vector<64xf32>
      %22 = vector.shape_cast %21 : vector<64xf32> to vector<64x1xf32>
      %cst_15 = arith.constant 3.125000e-02 : f32
      %23 = vector.broadcast %cst_15 : f32 to vector<64x1xf32>
      %24 = arith.mulf %22, %23 : vector<64x1xf32>
      %25 = arith.mulf %20, %20 : vector<64x128xf32>
      %cst_16 = arith.constant dense<0.000000e+00> : vector<64xf32>
      %26 = vector.multi_reduction <add>, %25, %cst_16 [1] : vector<64x128xf32> to vector<64xf32>
      %27 = vector.shape_cast %26 : vector<64xf32> to vector<64x1xf32>
      %cst_17 = arith.constant 3.125000e-02 : f32
      %28 = vector.broadcast %cst_17 : f32 to vector<64x1xf32>
      %29 = arith.mulf %27, %28 : vector<64x1xf32>
      %30 = arith.mulf %24, %24 : vector<64x1xf32>
      %31 = arith.subf %29, %30 : vector<64x1xf32>
      %cst_18 = arith.constant 0.000000e+00 : f32
      %32 = vector.broadcast %cst_18 : f32 to vector<64x1xf32>
      %33 = arith.maximumf %31, %32 : vector<64x1xf32>
      %34 = vector.broadcast %24 : vector<64x1xf32> to vector<64x128xf32>
      %35 = arith.subf %20, %34 : vector<64x128xf32>
      %cst_19 = arith.constant 9.99999974E-6 : f32
      %36 = vector.broadcast %cst_19 : f32 to vector<64x1xf32>
      %37 = arith.addf %33, %36 : vector<64x1xf32>
      %38 = math.rsqrt %37 : vector<64x1xf32>
      %39 = vector.broadcast %38 : vector<64x1xf32> to vector<64x128xf32>
      %40 = arith.mulf %35, %39 : vector<64x128xf32>
      %c0_20 = arith.constant 0 : index
      %c0_21 = arith.constant 0 : index
      %41 = vector.load %arg5[%c0_20, %c0_21] : memref<1x128xf32, #tpu.memory_space<vmem>>, vector<1x128xf32>
      %42 = vector.broadcast %41 : vector<1x128xf32> to vector<64x128xf32>
      %43 = arith.mulf %40, %42 : vector<64x128xf32>
      %c0_22 = arith.constant 0 : index
      %c0_23 = arith.constant 0 : index
      %44 = vector.load %arg6[%c0_22, %c0_23] : memref<1x128xf32, #tpu.memory_space<vmem>>, vector<1x128xf32>
      %45 = vector.broadcast %44 : vector<1x128xf32> to vector<64x128xf32>
      %46 = arith.addf %43, %45 : vector<64x128xf32>
      %c64_i32 = arith.constant 64 : i32
      %47 = arith.muli %arg0, %c64_i32 : i32
      %48 = tpu.iota {dimensions = array<i32: 0>} : vector<64x128xi32>
      %49 = vector.broadcast %47 : i32 to vector<64x128xi32>
      %50 = arith.addi %49, %48 : vector<64x128xi32>
      %c32_i32 = arith.constant 32 : i32
      %51 = vector.broadcast %c32_i32 : i32 to vector<64x128xi32>
      %52 = arith.cmpi slt, %50, %51 : vector<64x128xi32>
      %cst_24 = arith.constant 0.000000e+00 : f32
      %53 = vector.broadcast %cst_24 : f32 to vector<64x128xf32>
      %54 = arith.select %52, %46, %53 : vector<64x128xi1>, vector<64x128xf32>
      %55 = arith.truncf %54 : vector<64x128xf32> to vector<64x128xbf16>
      %c0_25 = arith.constant 0 : index
      %c0_26 = arith.constant 0 : index
      %56 = vector.load %arg7[%c0_25, %c0_26] : memref<128x128xbf16, #tpu.memory_space<vmem>>, vector<128x128xbf16>
      %cst_27 = arith.constant dense<0.000000e+00> : vector<64x128xf32>
      %57 = tpu.matmul %55, %56, %cst_27 {dimension_numbers = #tpu.dot_dimension_numbers<[1], [0], [0], [1], [0, 0, 1, 1], [], []>} : vector<64x128xbf16>, vector<128x128xbf16>, vector<64x128xf32> -> vector<64x128xf32>
      %58 = arith.truncf %57 : vector<64x128xf32> to vector<64x128xbf16>
      %c0_28 = arith.constant 0 : index
      %c0_29 = arith.constant 0 : index
      %59 = vector.load %arg8[%c0_28, %c0_29] : memref<64x128xbf16, #tpu.memory_space<vmem>>, vector<64x128xbf16>
      tpu.vector_store %arg8[%c0_28, %c0_29], %58 {strides = array<i32>} : memref<64x128xbf16, #tpu.memory_space<vmem>>, vector<64x128xbf16>,
    } else {
    }
    return
  }
  func.func @transform_0(%arg0: i32, %arg1: i32) -> (i32, i32) {
    %c0_i32 = arith.constant 0 : i32
    return %arg0, %arg1 : i32, i32
  }
  func.func @transform_1(%arg0: i32, %arg1: i32) -> (i32, i32) {
    %c0_i32 = arith.constant 0 : i32
    %c0_i32_0 = arith.constant 0 : i32
    %c0_i32_1 = arith.constant 0 : i32
    return %c0_i32, %c0_i32_0 : i32, i32
  }
  func.func @transform_2(%arg0: i32, %arg1: i32) -> (i32, i32) {
    %c0_i32 = arith.constant 0 : i32
    %c0_i32_0 = arith.constant 0 : i32
    %c0_i32_1 = arith.constant 0 : i32
    return %c0_i32, %c0_i32_0 : i32, i32
  }
  func.func @transform_3(%arg0: i32, %arg1: i32) -> (i32, i32) {
    %c0_i32 = arith.constant 0 : i32
    %c0_i32_0 = arith.constant 0 : i32
    %c0_i32_1 = arith.constant 0 : i32
    return %c0_i32, %c0_i32_0 : i32, i32
  }
  func.func @transform_4(%arg0: i32, %arg1: i32) -> (i32, i32) {
    %c0_i32 = arith.constant 0 : i32
    %c0_i32_0 = arith.constant 0 : i32
    %c0_i32_1 = arith.constant 0 : i32
    return %c0_i32, %c0_i32_0 : i32, i32
  }
  func.func @transform_5(%arg0: i32, %arg1: i32) -> (i32, i32) {
    %c0_i32 = arith.constant 0 : i32
    %c0_i32_0 = arith.constant 0 : i32
    %c0_i32_1 = arith.constant 0 : i32
    return %c0_i32, %c0_i32_0 : i32, i32
  }
  func.func @transform_6(%arg0: i32, %arg1: i32) -> (i32, i32) {
    %c0_i32 = arith.constant 0 : i32
    %c0_i32_0 = arith.constant 0 : i32
    return %arg0, %c0_i32 : i32, i32
  }
}

</mosaic_0001>

<llo_original>
// kernel: tpu_custom_call.1
$region0: #{tpu_custom_call.1}
  #allocation0 [shape = 'u32[]', space=smem, size = 0x4, offset = 0x4, fixed_abs, tag = 'smem constant byte address 0x4 - core index']
  #allocation1 [shape = 'u32[72,128]{1,0:T(1,128)}', space=vmem, size = 0x9000, scoped, tag = 'internal scratch']
  #allocation2 [shape = 'f32[64,128]{1,0:T(8,128)}', space=vmem, size = 0x8000, scoped, tag = 'scratch operand']
  %s0 = inlined_call_operand.hbm [shape: bf16[128,128], index: 0, kind: input, shape index: {}]
  %s1 = inlined_call_operand.hbm [shape: bf16[128,128], index: 1, kind: input, shape index: {}]
  %s2 = inlined_call_operand.vmem [shape: f32[1,128], index: 2, kind: input, shape index: {}]
  %s3 = inlined_call_operand.vmem [shape: f32[1,128], index: 3, kind: input, shape index: {}]
  %s4 = inlined_call_operand.vmem [shape: f32[1,128], index: 4, kind: input, shape index: {}]
  %s5 = inlined_call_operand.hbm [shape: bf16[128,128], index: 5, kind: input, shape index: {}]
  %s6 = inlined_call_operand.hbm [shape: bf16[128,128], index: 6, kind: output, shape index: {}]
  %s7 = sld [smem:[#allocation0]]
  $region77: #{tpu_custom_call.1} parent=0
    _
  %s9 = ssub.s32 1, %s7
  %s10 = scalar_select 0, %s9, %s7
  $region1: #{tpu_custom_call.1} parent=0
    #allocation3 [shape = 'u8[32768]{0}', space=vmem, size = 0x8000, scoped, tag = 'input window, operand 0']
    #allocation4 [shape = 's32[2]{0}', space=sflag, size = 0x8, scoped, tag = 'scoped memory for tpu_custom_call.1']
    #allocation5 [shape = 's32[2]{0}', space=sflag, size = 0x8, scoped, tag = 'scoped memory for tpu_custom_call.1']
    #allocation6 [shape = 'u8[32768]{0}', space=vmem, size = 0x8000, scoped, tag = 'input window, operand 1, single buffered']
    #allocation7 [shape = 's32[1]{0}', space=sflag, size = 0x4, scoped, tag = 'scoped memory for tpu_custom_call.1']
    #allocation8 [shape = 'u8[32768]{0}', space=vmem, size = 0x8000, scoped, tag = 'input window, operand 5, single buffered']
    #allocation9 [shape = 'u8[32768]{0}', space=vmem, size = 0x8000, scoped, tag = 'output window, operand 0']
    %11 = vsyncpa [#allocation4], 0
    %s12 = scalar_lea.sflag [#allocation4], 1
    %13 = vsyncpa %s12, 0
    %14 = vsyncpa [#allocation7], 0
    %15 = vsyncpa [#allocation5], 0
    %s16 = scalar_lea.sflag [#allocation5], 1
    %17 = vsyncpa %s16, 0
    loop: start=0, step=1, limit=4
    $region2: #{tpu_custom_call.1} parent=1 // loop_pre_header
      _
    $region3: #{tpu_custom_call.1} parent=1 // loop_header
      %s19 = sphi 0, %s23
      %p20 = scmp.ge.s32.totalorder %s19, 4
      %s26 = sphi 0, %s38
      %s27 = sphi 0, %s34
      %s28 = sphi 0, %s26
      %s29 = sphi 0, %s27
      %s30 = sphi 0, %s28
      %s31 = sphi 0, %s29
      %s43 = sphi 0, %s45
      %s46 = sphi 0, %s43
      %s47 = sphi 0, %s46
      %s63 = sphi 0, %s47
      %s67 = sphi 0, %s67
      %s69 = sphi 0, %s67
      %s70 = sphi 0, %s69
      %s84 = sphi 0, %s70
      %s88 = sphi 0, %s88
      %s90 = sphi 0, %s88
      %s91 = sphi 0, %s90
      %s105 = sphi 0, %s91
      %s109 = sphi 0, %s109
      %s111 = sphi 0, %s109
      %s112 = sphi 0, %s111
      %s126 = sphi 0, %s112
      %s130 = sphi 0, %s130
      %s132 = sphi 0, %s130
      %s133 = sphi 0, %s132
      %s147 = sphi 0, %s133
      %s151 = sphi 0, %s151
      %s153 = sphi 0, %s151
      %s154 = sphi 0, %s153
      %s168 = sphi 0, %s154
      %s174 = sphi 0, %s176
      %s177 = sphi 0, %s174
      %s178 = sphi 0, %s177
      %s194 = sphi 0, %s178
    $region4: #{tpu_custom_call.1} parent=1 // loop_header_branch
      %22 = sbr.rel (%p20) target = $region8
    $region5: #{tpu_custom_call.1} parent=1 // loop_body
      %s24 = ssub.s32 %s19, 1
      %s25 = ssub.s32 %s19, 2
      %s32 = sadd.s32 1, %s27
      %p33 = scmp.ge.s32.totalorder %s32, 1
      %s34 = scalar_select %p33, 0, %s32
      %s35 = sadd.s32 1, %s26
      %s36 = scalar_select %p33, %s35, %s26
      %p37 = scmp.ge.s32.totalorder %s36, 2
      %s38 = scalar_select %p37, 0, %s36
      %s39 = ssub.s32 %s26, %s38
      %s40 = ssub.s32 %s27, %s34
      %s41 = sor.u32 %s39, %s40
      %p42 = scmp.eq.s32.totalorder %s41, 0
      %s44 = sadd.s32 %s43, 1
      %s45 = scalar_select %p42, %s43, %s44
      %p48 = pneg %p42
      %p49 = scmp.eq.s32.totalorder %s19, 1
      %p50 = por %p48, %p49
      %p51 = scmp.ne.s32.totalorder %s43, %s46
      %p52 = scmp.eq.s32.totalorder %s19, 0
      %p53 = por %p51, %p52
      %p54 = scmp.ne.s32.totalorder %s43, %s46
      %p55 = scmp.eq.s32.totalorder %s24, 1
      %p56 = por %p54, %p55
      %p57 = scmp.ne.s32.totalorder %s46, %s47
      %p58 = scmp.eq.s32.totalorder %s24, 0
      %p59 = por %p57, %p58
      %p60 = scmp.ne.s32.totalorder %s46, %s47
      %p61 = scmp.eq.s32.totalorder %s25, 1
      %p62 = por %p60, %p61
      %p64 = scmp.ne.s32.totalorder %s47, %s63
      %p65 = scmp.eq.s32.totalorder %s25, 0
      %p66 = por %p64, %p65
      %s68 = sadd.s32 %s67, 1
      %p71 = scmp.eq.s32.totalorder %s19, 1
      %p72 = scmp.ne.s32.totalorder %s67, %s69
      %p73 = scmp.eq.s32.totalorder %s19, 0
      %p74 = por %p72, %p73
      %p75 = scmp.ne.s32.totalorder %s67, %s69
      %p76 = scmp.eq.s32.totalorder %s24, 1
      %p77 = por %p75, %p76
      %p78 = scmp.ne.s32.totalorder %s69, %s70
      %p79 = scmp.eq.s32.totalorder %s24, 0
      %p80 = por %p78, %p79
      %p81 = scmp.ne.s32.totalorder %s69, %s70
      %p82 = scmp.eq.s32.totalorder %s25, 1
      %p83 = por %p81, %p82
      %p85 = scmp.ne.s32.totalorder %s70, %s84
      %p86 = scmp.eq.s32.totalorder %s25, 0
      %p87 = por %p85, %p86
      %s89 = sadd.s32 %s88, 1
      %p92 = scmp.eq.s32.totalorder %s19, 1
      %p93 = scmp.ne.s32.totalorder %s88, %s90
      %p94 = scmp.eq.s32.totalorder %s19, 0
      %p95 = por %p93, %p94
      %p96 = scmp.ne.s32.totalorder %s88, %s90
      %p97 = scmp.eq.s32.totalorder %s24, 1
      %p98 = por %p96, %p97
      %p99 = scmp.ne.s32.totalorder %s90, %s91
      %p100 = scmp.eq.s32.totalorder %s24, 0
      %p101 = por %p99, %p100
      %p102 = scmp.ne.s32.totalorder %s90, %s91
      %p103 = scmp.eq.s32.totalorder %s25, 1
      %p104 = por %p102, %p103
      %p106 = scmp.ne.s32.totalorder %s91, %s105
      %p107 = scmp.eq.s32.totalorder %s25, 0
      %p108 = por %p106, %p107
      %s110 = sadd.s32 %s109, 1
      %p113 = scmp.eq.s32.totalorder %s19, 1
      %p114 = scmp.ne.s32.totalorder %s109, %s111
      %p115 = scmp.eq.s32.totalorder %s19, 0
      %p116 = por %p114, %p115
      %p117 = scmp.ne.s32.totalorder %s109, %s111
      %p118 = scmp.eq.s32.totalorder %s24, 1
      %p119 = por %p117, %p118
      %p120 = scmp.ne.s32.totalorder %s111, %s112
      %p121 = scmp.eq.s32.totalorder %s24, 0
      %p122 = por %p120, %p121
      %p123 = scmp.ne.s32.totalorder %s111, %s112
      %p124 = scmp.eq.s32.totalorder %s25, 1
      %p125 = por %p123, %p124
      %p127 = scmp.ne.s32.totalorder %s112, %s126
      %p128 = scmp.eq.s32.totalorder %s25, 0
      %p129 = por %p127, %p128
      %s131 = sadd.s32 %s130, 1
      %p134 = scmp.eq.s32.totalorder %s19, 1
      %p135 = scmp.ne.s32.totalorder %s130, %s132
      %p136 = scmp.eq.s32.totalorder %s19, 0
      %p137 = por %p135, %p136
      %p138 = scmp.ne.s32.totalorder %s130, %s132
      %p139 = scmp.eq.s32.totalorder %s24, 1
      %p140 = por %p138, %p139
      %p141 = scmp.ne.s32.totalorder %s132, %s133
      %p142 = scmp.eq.s32.totalorder %s24, 0
      %p143 = por %p141, %p142
      %p144 = scmp.ne.s32.totalorder %s132, %s133
      %p145 = scmp.eq.s32.totalorder %s25, 1
      %p146 = por %p144, %p145
      %p148 = scmp.ne.s32.totalorder %s133, %s147
      %p149 = scmp.eq.s32.totalorder %s25, 0
      %p150 = por %p148, %p149
      %s152 = sadd.s32 %s151, 1
      %p155 = scmp.eq.s32.totalorder %s19, 1
      %p156 = scmp.ne.s32.totalorder %s151, %s153
      %p157 = scmp.eq.s32.totalorder %s19, 0
      %p158 = por %p156, %p157
      %p159 = scmp.ne.s32.totalorder %s151, %s153
      %p160 = scmp.eq.s32.totalorder %s24, 1
      %p161 = por %p159, %p160
      %p162 = scmp.ne.s32.totalorder %s153, %s154
      %p163 = scmp.eq.s32.totalorder %s24, 0
      %p164 = por %p162, %p163
      %p165 = scmp.ne.s32.totalorder %s153, %s154
      %p166 = scmp.eq.s32.totalorder %s25, 1
      %p167 = por %p165, %p166
      %p169 = scmp.ne.s32.totalorder %s154, %s168
      %p170 = scmp.eq.s32.totalorder %s25, 0
      %p171 = por %p169, %p170
      %s172 = ssub.s32 %s26, %s38
      %p173 = scmp.eq.s32.totalorder %s172, 0
      %s175 = sadd.s32 %s174, 1
      %s176 = scalar_select %p173, %s174, %s175
      %p179 = pneg %p173
      %p180 = scmp.eq.s32.totalorder %s19, 1
      %p181 = por %p179, %p180
      %p182 = scmp.ne.s32.totalorder %s174, %s177
      %p183 = scmp.eq.s32.totalorder %s19, 0
      %p184 = por %p182, %p183
      %p185 = scmp.ne.s32.totalorder %s174, %s177
      %p186 = scmp.eq.s32.totalorder %s24, 1
      %p187 = por %p185, %p186
      %p188 = scmp.ne.s32.totalorder %s177, %s178
      %p189 = scmp.eq.s32.totalorder %s24, 0
      %p190 = por %p188, %p189
      %p191 = scmp.ne.s32.totalorder %s177, %s178
      %p192 = scmp.eq.s32.totalorder %s25, 1
      %p193 = por %p191, %p192
      %p195 = scmp.ne.s32.totalorder %s178, %s194
      %p196 = scmp.eq.s32.totalorder %s25, 0
      %p197 = por %p195, %p196
      %p198 = scmp.le.s32.totalorder 1, %s19
      %p199 = scmp.lt.s32.totalorder %s19, 3
      %p200 = pnand %p198, %p199
      %p201 = pneg %p200
      // Predicated region
      $region9: #{tpu_custom_call.1} parent=5 // pred_check
        _
      $region10: #{tpu_custom_call.1} parent=5 // pred_check_branch
        %203 = sbr.rel (%p200) target = $region12
      $region11: #{tpu_custom_call.1} parent=5 // pred_region
        %s204 = ssub.s32 %s19, 1
        // Predicated region
        $region13: #{tpu_custom_call.1} parent=11 // pred_check
          %p205 = pneg %p80
        $region14: #{tpu_custom_call.1} parent=11 // pred_check_branch
          %207 = sbr.rel (%p205) target = $region16
        $region15: #{tpu_custom_call.1} parent=11 // pred_region
          %209 = vsyncadd [#allocation7], 0
          %s210 = sshll.u32 %s1, 4
          %s211 = int_to_ptr.hbm [resolvable:$true] %s210
          %s212 = sshll.u32 [#allocation6], 4
          %s213 = int_to_ptr.vmem [resolvable:$true] %s212
          %218 = dma.hbm_to_vmem [thread:$0]  %s211, 1024, %s213, [#allocation7], 64, 64, 4
        $region16: #{tpu_custom_call.1} parent=11 // pred_fallthru
          _
        // Predicated region
        $region17: #{tpu_custom_call.1} parent=11 // pred_check
          %p219 = pneg %p101
        $region18: #{tpu_custom_call.1} parent=11 // pred_check_branch
          %221 = sbr.rel (%p219) target = $region20
        $region19: #{tpu_custom_call.1} parent=11 // pred_region
          _
        $region20: #{tpu_custom_call.1} parent=11 // pred_fallthru
          _
        // Predicated region
        $region21: #{tpu_custom_call.1} parent=11 // pred_check
          %p222 = pneg %p122
        $region22: #{tpu_custom_call.1} parent=11 // pred_check_branch
          %224 = sbr.rel (%p222) target = $region24
        $region23: #{tpu_custom_call.1} parent=11 // pred_region
          _
        $region24: #{tpu_custom_call.1} parent=11 // pred_fallthru
          _
        // Predicated region
        $region25: #{tpu_custom_call.1} parent=11 // pred_check
          %p225 = pneg %p143
        $region26: #{tpu_custom_call.1} parent=11 // pred_check_branch
          %227 = sbr.rel (%p225) target = $region28
        $region27: #{tpu_custom_call.1} parent=11 // pred_region
          _
        $region28: #{tpu_custom_call.1} parent=11 // pred_fallthru
          _
        // Predicated region
        $region29: #{tpu_custom_call.1} parent=11 // pred_check
          %p228 = pneg %p164
        $region30: #{tpu_custom_call.1} parent=11 // pred_check_branch
          %230 = sbr.rel (%p228) target = $region32
        $region31: #{tpu_custom_call.1} parent=11 // pred_region
          %232 = vsyncadd [#allocation7], 0
          %s233 = sshll.u32 %s5, 4
          %s234 = int_to_ptr.hbm [resolvable:$true] %s233
          %s235 = sshll.u32 [#allocation8], 4
          %s236 = int_to_ptr.vmem [resolvable:$true] %s235
          %241 = dma.hbm_to_vmem [thread:$0]  %s234, 1024, %s236, [#allocation7], 64, 64, 4
        $region32: #{tpu_custom_call.1} parent=11 // pred_fallthru
          _
      $region12: #{tpu_custom_call.1} parent=5 // pred_fallthru
        _
      %p242 = scmp.lt.s32.totalorder %s19, 2
      // Predicated region
      $region33: #{tpu_custom_call.1} parent=5 // pred_check
        %p243 = pneg %p242
      $region34: #{tpu_custom_call.1} parent=5 // pred_check_branch
        %245 = sbr.rel (%p243) target = $region36
      $region35: #{tpu_custom_call.1} parent=5 // pred_region
        // Predicated region
        $region37: #{tpu_custom_call.1} parent=35 // pred_check
          %p246 = pneg %p53
        $region38: #{tpu_custom_call.1} parent=35 // pred_check_branch
          %248 = sbr.rel (%p246) target = $region40
        $region39: #{tpu_custom_call.1} parent=35 // pred_region
          %s249 = sand.u32 %s43, 1
          %s250 = scalar_lea.sflag [#allocation4], %s249
          %s251 = sand.u32 %s43, 1
          %s252 = smul.addr %s251, 32
          %s253 = scalar_lea.vmem [#allocation3], %s252
          %s254 = smul.u32 8, %s26
          %256 = vsyncadd %s250, 0
          %s257 = sadd.s32 %s27, %s254
          %s258 = smul.addr %s257, 4
          %s259 = scalar_lea.hbm %s0, %s258
          %s260 = sshll.u32 %s259, 4
          %s261 = int_to_ptr.hbm [resolvable:$true] %s260
          %s262 = sshll.u32 %s253, 4
          %s263 = int_to_ptr.vmem [resolvable:$true] %s262
          %268 = dma.hbm_to_vmem [thread:$0]  %s261, 512, %s263, %s250, 64, 64, 4
        $region40: #{tpu_custom_call.1} parent=35 // pred_fallthru
          _
      $region36: #{tpu_custom_call.1} parent=5 // pred_fallthru
        _
      %p269 = scmp.le.s32.totalorder 1, %s19
      %p270 = scmp.lt.s32.totalorder %s19, 3
      %p271 = pnand %p269, %p270
      %p272 = pneg %p271
      // Predicated region
      $region41: #{tpu_custom_call.1} parent=5 // pred_check
        _
      $region42: #{tpu_custom_call.1} parent=5 // pred_check_branch
        %274 = sbr.rel (%p271) target = $region44
      $region43: #{tpu_custom_call.1} parent=5 // pred_region
        %s275 = ssub.s32 %s19, 1
        %s276 = sand.u32 %s46, 1
        %s277 = scalar_lea.sflag [#allocation4], %s276
        %s278 = sand.u32 %s46, 1
        %s279 = smul.addr %s278, 32
        %s280 = scalar_lea.vmem [#allocation3], %s279
        // Predicated region
        $region45: #{tpu_custom_call.1} parent=43 // pred_check
          %p281 = pneg %p59
        $region46: #{tpu_custom_call.1} parent=43 // pred_check_branch
          %283 = sbr.rel (%p281) target = $region48
        $region47: #{tpu_custom_call.1} parent=43 // pred_region
          %285 = dma.done %s277, 512
        $region48: #{tpu_custom_call.1} parent=43 // pred_fallthru
          _
        // Predicated region
        $region49: #{tpu_custom_call.1} parent=43 // pred_check
          %p286 = pneg %p80
        $region50: #{tpu_custom_call.1} parent=43 // pred_check_branch
          %288 = sbr.rel (%p286) target = $region52
        $region51: #{tpu_custom_call.1} parent=43 // pred_region
          %290 = dma.done [#allocation7], 1024
        $region52: #{tpu_custom_call.1} parent=43 // pred_fallthru
          _
        // Predicated region
        $region53: #{tpu_custom_call.1} parent=43 // pred_check
          %p291 = pneg %p164
        $region54: #{tpu_custom_call.1} parent=43 // pred_check_branch
          %293 = sbr.rel (%p291) target = $region56
        $region55: #{tpu_custom_call.1} parent=43 // pred_region
          %295 = dma.done [#allocation7], 1024
        $region56: #{tpu_custom_call.1} parent=43 // pred_fallthru
          _
        %s296 = sand.u32 %s46, 1
        %s297 = scalar_lea.sflag [#allocation4], %s296
        %s298 = sand.u32 %s46, 1
        %s299 = smul.addr %s298, 32
        %s300 = scalar_lea.vmem [#allocation3], %s299
        %p301 = pneg %p59
        %p302 = pneg %p56
        %p303 = pneg %p80
        %p304 = pneg %p77
        %p305 = pneg %p101
        %p306 = pneg %p98
        %p307 = pneg %p122
        %p308 = pneg %p119
        %p309 = pneg %p143
        %p310 = pneg %p140
        %p311 = pneg %p164
        %p312 = pneg %p161
        %p313 = pneg %p190
        %p314 = pneg %p187
        %s315 = sand.u32 %s177, 1
        %s316 = scalar_lea.sflag [#allocation5], %s315
        %s317 = sand.u32 %s177, 1
        %s318 = smul.addr %s317, 32
        %s319 = scalar_lea.vmem [#allocation9], %s318
        %s320 = smul.u32 8, %s28
        %s321 = smul.u32 8, %s28
        %p322 = scmp.eq.s32.totalorder %s29, 0
        // Predicated region
        $region57: #{tpu_custom_call.1} parent=43 // pred_check
          %p323 = pneg %p322
        $region58: #{tpu_custom_call.1} parent=43 // pred_check_branch
          %325 = sbr.rel (%p323) target = $region60
        $region59: #{tpu_custom_call.1} parent=43 // pred_region
          %326 = vst [vmem:[#allocation2] sm:$0xff] 0.0
          %327 = vst [vmem:[#allocation2 + $0x8] sm:$0xff] 0.0
          %328 = vst [vmem:[#allocation2 + $0x10] sm:$0xff] 0.0
          %329 = vst [vmem:[#allocation2 + $0x18] sm:$0xff] 0.0
          %330 = vst [vmem:[#allocation2 + $0x20] sm:$0xff] 0.0
          %331 = vst [vmem:[#allocation2 + $0x28] sm:$0xff] 0.0
          %332 = vst [vmem:[#allocation2 + $0x30] sm:$0xff] 0.0
          %333 = vst [vmem:[#allocation2 + $0x38] sm:$0xff] 0.0
        $region60: #{tpu_custom_call.1} parent=43 // pred_fallthru
          _
        %s334 = smul.u32 %s29, 128
        %s335 = sshra.s32 %s334, 3
        %s336 = sand.u32 %s334, 7
        %s337 = smul.addr %s335, 4
        %s338 = scalar_lea.vmem [#allocation6], %s337
        %v339 = vld [vmem:[%s338] sm:$0xf]
        %v340 = vld [vmem:[%s338 + $0x4] sm:$0xf]
        %v341 = vld [vmem:[%s338 + $0x8] sm:$0xf]
        %v342 = vld [vmem:[%s338 + $0xc] sm:$0xf]
        %v343 = vld [vmem:[%s338 + $0x10] sm:$0xf]
        %v344 = vld [vmem:[%s338 + $0x14] sm:$0xf]
        %v345 = vld [vmem:[%s338 + $0x18] sm:$0xf]
        %v346 = vld [vmem:[%s338 + $0x1c] sm:$0xf]
        %v347 = vld [vmem:[%s338 + $0x20] sm:$0xf]
        %v348 = vld [vmem:[%s338 + $0x24] sm:$0xf]
        %v349 = vld [vmem:[%s338 + $0x28] sm:$0xf]
        %v350 = vld [vmem:[%s338 + $0x2c] sm:$0xf]
        %v351 = vld [vmem:[%s338 + $0x30] sm:$0xf]
        %v352 = vld [vmem:[%s338 + $0x34] sm:$0xf]
        %v353 = vld [vmem:[%s338 + $0x38] sm:$0xf]
        %v354 = vld [vmem:[%s338 + $0x3c] sm:$0xf]
        %v355 = vld [vmem:[#allocation2] sm:$0xff]
        %v356 = vld [vmem:[#allocation2 + $0x8] sm:$0xff]
        %v357 = vld [vmem:[#allocation2 + $0x10] sm:$0xff]
        %v358 = vld [vmem:[#allocation2 + $0x18] sm:$0xff]
        %v359 = vld [vmem:[#allocation2 + $0x20] sm:$0xff]
        %v360 = vld [vmem:[#allocation2 + $0x28] sm:$0xff]
        %v361 = vld [vmem:[#allocation2 + $0x30] sm:$0xff]
        %v362 = vld [vmem:[#allocation2 + $0x38] sm:$0xff]
        %v363 = vld [vmem:[%s280] sm:$0xf]
        %v364 = vld [vmem:[%s280 + $0x4] sm:$0xf]
        %v365 = vld [vmem:[%s280 + $0x8] sm:$0xf]
        %v366 = vld [vmem:[%s280 + $0xc] sm:$0xf]
        %v367 = vld [vmem:[%s280 + $0x10] sm:$0xf]
        %v368 = vld [vmem:[%s280 + $0x14] sm:$0xf]
        %v369 = vld [vmem:[%s280 + $0x18] sm:$0xf]
        %v370 = vld [vmem:[%s280 + $0x1c] sm:$0xf]
        %v379 = vunpack.c.l.b16 %v363
        %v380 = vunpack.c.l.b16 %v364
        %v381 = vunpack.c.l.b16 %v365
        %v382 = vunpack.c.l.b16 %v366
        %v383 = vunpack.c.l.b16 %v367
        %v384 = vunpack.c.l.b16 %v368
        %v385 = vunpack.c.l.b16 %v369
        %v386 = vunpack.c.l.b16 %v370
        %v387 = vpack.c.b16 %v380, %v379
        %v388 = vpack.c.b16 %v382, %v381
        %v389 = vpack.c.b16 %v384, %v383
        %v390 = vpack.c.b16 %v386, %v385
        %v411 = vunpack.c.l.b16 %v339
        %v412 = vunpack.c.l.b16 %v340
        %v413 = vunpack.c.l.b16 %v341
        %v414 = vunpack.c.l.b16 %v342
        %v415 = vunpack.c.l.b16 %v343
        %v416 = vunpack.c.l.b16 %v344
        %v417 = vunpack.c.l.b16 %v345
        %v418 = vunpack.c.l.b16 %v346
        %v419 = vunpack.c.l.b16 %v347
        %v420 = vunpack.c.l.b16 %v348
        %v421 = vunpack.c.l.b16 %v349
        %v422 = vunpack.c.l.b16 %v350
        %v423 = vunpack.c.l.b16 %v351
        %v424 = vunpack.c.l.b16 %v352
        %v425 = vunpack.c.l.b16 %v353
        %v426 = vunpack.c.l.b16 %v354
        %v427 = vpack.c.b16 %v412, %v411
        %v428 = vpack.c.b16 %v414, %v413
        %v429 = vpack.c.b16 %v416, %v415
        %v430 = vpack.c.b16 %v418, %v417
        %v431 = vpack.c.b16 %v420, %v419
        %v432 = vpack.c.b16 %v422, %v421
        %v433 = vpack.c.b16 %v424, %v423
        %v434 = vpack.c.b16 %v426, %v425
        %443 = vmatpush.bf16.msra.mxu0 %v434
        %444 = vmatpush.bf16.msra.mxu0 %v433
        %445 = vmatpush.bf16.msra.mxu0 %v432
        %446 = vmatpush.bf16.msra.mxu0 %v431
        %447 = vmatpush.bf16.msra.mxu0 %v430
        %448 = vmatpush.bf16.msra.mxu0 %v429
        %449 = vmatpush.bf16.msra.mxu0 %v428
        %450 = vmatpush.bf16.msra.mxu0 %v427
        %451 = vmatmul.bf16.gmra.mxu0 %v387
        %v452 = vpop.f32.mrf.mxu0
        %v453 = vadd.f32 0.0, %v452
        %v454 = vpop.f32.mrf.mxu0
        %v455 = vadd.f32 0.0, %v454
        %456 = vmatmul.bf16.gmra.mxu0 %v388
        %v457 = vpop.f32.mrf.mxu0
        %v458 = vadd.f32 0.0, %v457
        %v459 = vpop.f32.mrf.mxu0
        %v460 = vadd.f32 0.0, %v459
        %461 = vmatmul.bf16.gmra.mxu0 %v389
        %v462 = vpop.f32.mrf.mxu0
        %v463 = vadd.f32 0.0, %v462
        %v464 = vpop.f32.mrf.mxu0
        %v465 = vadd.f32 0.0, %v464
        %466 = vmatmul.bf16.gmra.mxu0 %v390
        %v467 = vpop.f32.mrf.mxu0
        %v468 = vadd.f32 0.0, %v467
        %v469 = vpop.f32.mrf.mxu0
        %v470 = vadd.f32 0.0, %v469
        %471 = vdwg.mxu0
        %v472 = vadd.f32 %v355, %v453
        %v473 = vadd.f32 %v356, %v455
        %v474 = vadd.f32 %v357, %v458
        %v475 = vadd.f32 %v358, %v460
        %v476 = vadd.f32 %v359, %v463
        %v477 = vadd.f32 %v360, %v465
        %v478 = vadd.f32 %v361, %v468
        %v479 = vadd.f32 %v362, %v470
        %480 = vst [vmem:[#allocation2] sm:$0xff] %v472
        %481 = vst [vmem:[#allocation2 + $0x8] sm:$0xff] %v473
        %482 = vst [vmem:[#allocation2 + $0x10] sm:$0xff] %v474
        %483 = vst [vmem:[#allocation2 + $0x18] sm:$0xff] %v475
        %484 = vst [vmem:[#allocation2 + $0x20] sm:$0xff] %v476
        %485 = vst [vmem:[#allocation2 + $0x28] sm:$0xff] %v477
        %486 = vst [vmem:[#allocation2 + $0x30] sm:$0xff] %v478
        %487 = vst [vmem:[#allocation2 + $0x38] sm:$0xff] %v479
        // Predicated region
        $region61: #{tpu_custom_call.1} parent=43 // pred_check
          %p488 = pneg %p322
        $region62: #{tpu_custom_call.1} parent=43 // pred_check_branch
          %490 = sbr.rel (%p488) target = $region64
        $region63: #{tpu_custom_call.1} parent=43 // pred_region
          %v491 = vld [vmem:[#allocation2] sm:$0xff]
          %v492 = vld [vmem:[#allocation2 + $0x8] sm:$0xff]
          %v493 = vld [vmem:[#allocation2 + $0x10] sm:$0xff]
          %v494 = vld [vmem:[#allocation2 + $0x18] sm:$0xff]
          %v495 = vld [vmem:[#allocation2 + $0x20] sm:$0xff]
          %v496 = vld [vmem:[#allocation2 + $0x28] sm:$0xff]
          %v497 = vld [vmem:[#allocation2 + $0x30] sm:$0xff]
          %v498 = vld [vmem:[#allocation2 + $0x38] sm:$0xff]
          %v499 = vld [vmem:[%s2] sm:$0x1]
          %v501 = vperm.slane %v499, 0
          %v503 = vadd.f32 %v491, %v501
          %v504 = vadd.f32 %v492, %v501
          %v505 = vadd.f32 %v493, %v501
          %v506 = vadd.f32 %v494, %v501
          %v507 = vadd.f32 %v495, %v501
          %v508 = vadd.f32 %v496, %v501
          %v509 = vadd.f32 %v497, %v501
          %v510 = vadd.f32 %v498, %v501
          %v511 = vmax.f32 %v503, 0.0
          %v512 = vmax.f32 %v504, 0.0
          %v513 = vmax.f32 %v505, 0.0
          %v514 = vmax.f32 %v506, 0.0
          %v515 = vmax.f32 %v507, 0.0
          %v516 = vmax.f32 %v508, 0.0
          %v517 = vmax.f32 %v509, 0.0
          %v518 = vmax.f32 %v510, 0.0
          %519 = vadd.xlane.f32.xlu0 %v511
          %v520 = vpop.xlane.xlu0 %519
          %521 = vadd.xlane.f32.xlu0 %v512
          %v522 = vpop.xlane.xlu0 %521
          %523 = vadd.xlane.f32.xlu0 %v513
          %v524 = vpop.xlane.xlu0 %523
          %525 = vadd.xlane.f32.xlu0 %v514
          %v526 = vpop.xlane.xlu0 %525
          %527 = vadd.xlane.f32.xlu0 %v515
          %v528 = vpop.xlane.xlu0 %527
          %529 = vadd.xlane.f32.xlu0 %v516
          %v530 = vpop.xlane.xlu0 %529
          %531 = vadd.xlane.f32.xlu0 %v517
          %v532 = vpop.xlane.xlu0 %531
          %533 = vadd.xlane.f32.xlu0 %v518
          %v534 = vpop.xlane.xlu0 %533
          %v535 = vmul.f32 %v520, 0.03125
          %v536 = vmul.f32 %v522, 0.03125
          %v537 = vmul.f32 %v524, 0.03125
          %v538 = vmul.f32 %v526, 0.03125
          %v539 = vmul.f32 %v528, 0.03125
          %v540 = vmul.f32 %v530, 0.03125
          %v541 = vmul.f32 %v532, 0.03125
          %v542 = vmul.f32 %v534, 0.03125
          %v543 = vmul.f32 %v511, %v511
          %v544 = vmul.f32 %v512, %v512
          %v545 = vmul.f32 %v513, %v513
          %v546 = vmul.f32 %v514, %v514
          %v547 = vmul.f32 %v515, %v515
          %v548 = vmul.f32 %v516, %v516
          %v549 = vmul.f32 %v517, %v517
          %v550 = vmul.f32 %v518, %v518
          %551 = vadd.xlane.f32.xlu0 %v543
          %v552 = vpop.xlane.xlu0 %551
          %553 = vadd.xlane.f32.xlu0 %v544
          %v554 = vpop.xlane.xlu0 %553
          %555 = vadd.xlane.f32.xlu0 %v545
          %v556 = vpop.xlane.xlu0 %555
          %557 = vadd.xlane.f32.xlu0 %v546
          %v558 = vpop.xlane.xlu0 %557
          %559 = vadd.xlane.f32.xlu0 %v547
          %v560 = vpop.xlane.xlu0 %559
          %561 = vadd.xlane.f32.xlu0 %v548
          %v562 = vpop.xlane.xlu0 %561
          %563 = vadd.xlane.f32.xlu0 %v549
          %v564 = vpop.xlane.xlu0 %563
          %565 = vadd.xlane.f32.xlu0 %v550
          %v566 = vpop.xlane.xlu0 %565
          %v567 = vmul.f32 %v552, 0.03125
          %v568 = vmul.f32 %v554, 0.03125
          %v569 = vmul.f32 %v556, 0.03125
          %v570 = vmul.f32 %v558, 0.03125
          %v571 = vmul.f32 %v560, 0.03125
          %v572 = vmul.f32 %v562, 0.03125
          %v573 = vmul.f32 %v564, 0.03125
          %v574 = vmul.f32 %v566, 0.03125
          %v575 = vmul.f32 %v535, %v535
          %v576 = vmul.f32 %v536, %v536
          %v577 = vmul.f32 %v537, %v537
          %v578 = vmul.f32 %v538, %v538
          %v579 = vmul.f32 %v539, %v539
          %v580 = vmul.f32 %v540, %v540
          %v581 = vmul.f32 %v541, %v541
          %v582 = vmul.f32 %v542, %v542
          %v583 = vsub.f32 %v567, %v575
          %v584 = vsub.f32 %v568, %v576
          %v585 = vsub.f32 %v569, %v577
          %v586 = vsub.f32 %v570, %v578
          %v587 = vsub.f32 %v571, %v579
          %v588 = vsub.f32 %v572, %v580
          %v589 = vsub.f32 %v573, %v581
          %v590 = vsub.f32 %v574, %v582
          %v591 = vmax.f32 %v583, 0.0
          %v592 = vmax.f32 %v584, 0.0
          %v593 = vmax.f32 %v585, 0.0
          %v594 = vmax.f32 %v586, 0.0
          %v595 = vmax.f32 %v587, 0.0
          %v596 = vmax.f32 %v588, 0.0
          %v597 = vmax.f32 %v589, 0.0
          %v598 = vmax.f32 %v590, 0.0
          %v599 = vsub.f32 %v511, %v535
          %v600 = vsub.f32 %v512, %v536
          %v601 = vsub.f32 %v513, %v537
          %v602 = vsub.f32 %v514, %v538
          %v603 = vsub.f32 %v515, %v539
          %v604 = vsub.f32 %v516, %v540
          %v605 = vsub.f32 %v517, %v541
          %v606 = vsub.f32 %v518, %v542
          %v607 = vadd.f32 %v591, 1e-05
          %v608 = vadd.f32 %v592, 1e-05
          %v609 = vadd.f32 %v593, 1e-05
          %v610 = vadd.f32 %v594, 1e-05
          %v611 = vadd.f32 %v595, 1e-05
          %v612 = vadd.f32 %v596, 1e-05
          %v613 = vadd.f32 %v597, 1e-05
          %v614 = vadd.f32 %v598, 1e-05
          %v615 = vrsqrt.pop %v607
          %v616 = vmul.f32 %v615, %v607
          %v617 = vmul.f32 %v616, %v615
          %v618 = vmul.f32 0.5, %v617
          %v619 = vsub.f32 1.5, %v618
          %v620 = vmul.f32 %v615, %v619
          %vm621 = vweird.f32 %v607
          %vm622 = vweird.f32 %v615
          %vm623 = vmor %vm621, %vm622
          %v624 = vsel %vm623, %v615, %v620
          %v625 = vrsqrt.pop %v608
          %v626 = vmul.f32 %v625, %v608
          %v627 = vmul.f32 %v626, %v625
          %v628 = vmul.f32 0.5, %v627
          %v629 = vsub.f32 1.5, %v628
          %v630 = vmul.f32 %v625, %v629
          %vm631 = vweird.f32 %v608
          %vm632 = vweird.f32 %v625
          %vm633 = vmor %vm631, %vm632
          %v634 = vsel %vm633, %v625, %v630
          %v635 = vrsqrt.pop %v609
          %v636 = vmul.f32 %v635, %v609
          %v637 = vmul.f32 %v636, %v635
          %v638 = vmul.f32 0.5, %v637
          %v639 = vsub.f32 1.5, %v638
          %v640 = vmul.f32 %v635, %v639
          %vm641 = vweird.f32 %v609
          %vm642 = vweird.f32 %v635
          %vm643 = vmor %vm641, %vm642
          %v644 = vsel %vm643, %v635, %v640
          %v645 = vrsqrt.pop %v610
          %v646 = vmul.f32 %v645, %v610
          %v647 = vmul.f32 %v646, %v645
          %v648 = vmul.f32 0.5, %v647
          %v649 = vsub.f32 1.5, %v648
          %v650 = vmul.f32 %v645, %v649
          %vm651 = vweird.f32 %v610
          %vm652 = vweird.f32 %v645
          %vm653 = vmor %vm651, %vm652
          %v654 = vsel %vm653, %v645, %v650
          %v655 = vrsqrt.pop %v611
          %v656 = vmul.f32 %v655, %v611
          %v657 = vmul.f32 %v656, %v655
          %v658 = vmul.f32 0.5, %v657
          %v659 = vsub.f32 1.5, %v658
          %v660 = vmul.f32 %v655, %v659
          %vm661 = vweird.f32 %v611
          %vm662 = vweird.f32 %v655
          %vm663 = vmor %vm661, %vm662
          %v664 = vsel %vm663, %v655, %v660
          %v665 = vrsqrt.pop %v612
          %v666 = vmul.f32 %v665, %v612
          %v667 = vmul.f32 %v666, %v665
          %v668 = vmul.f32 0.5, %v667
          %v669 = vsub.f32 1.5, %v668
          %v670 = vmul.f32 %v665, %v669
          %vm671 = vweird.f32 %v612
          %vm672 = vweird.f32 %v665
          %vm673 = vmor %vm671, %vm672
          %v674 = vsel %vm673, %v665, %v670
          %v675 = vrsqrt.pop %v613
          %v676 = vmul.f32 %v675, %v613
          %v677 = vmul.f32 %v676, %v675
          %v678 = vmul.f32 0.5, %v677
          %v679 = vsub.f32 1.5, %v678
          %v680 = vmul.f32 %v675, %v679
          %vm681 = vweird.f32 %v613
          %vm682 = vweird.f32 %v675
          %vm683 = vmor %vm681, %vm682
          %v684 = vsel %vm683, %v675, %v680
          %v685 = vrsqrt.pop %v614
          %v686 = vmul.f32 %v685, %v614
          %v687 = vmul.f32 %v686, %v685
          %v688 = vmul.f32 0.5, %v687
          %v689 = vsub.f32 1.5, %v688
          %v690 = vmul.f32 %v685, %v689
          %vm691 = vweird.f32 %v614
          %vm692 = vweird.f32 %v685
          %vm693 = vmor %vm691, %vm692
          %v694 = vsel %vm693, %v685, %v690
          %v695 = vmul.f32 %v599, %v624
          %v696 = vmul.f32 %v600, %v634
          %v697 = vmul.f32 %v601, %v644
          %v698 = vmul.f32 %v602, %v654
          %v699 = vmul.f32 %v603, %v664
          %v700 = vmul.f32 %v604, %v674
          %v701 = vmul.f32 %v605, %v684
          %v702 = vmul.f32 %v606, %v694
          %v703 = vld [vmem:[%s3] sm:$0x1]
          %v705 = vperm.slane %v703, 0
          %v707 = vmul.f32 %v695, %v705
          %v708 = vmul.f32 %v696, %v705
          %v709 = vmul.f32 %v697, %v705
          %v710 = vmul.f32 %v698, %v705
          %v711 = vmul.f32 %v699, %v705
          %v712 = vmul.f32 %v700, %v705
          %v713 = vmul.f32 %v701, %v705
          %v714 = vmul.f32 %v702, %v705
          %v715 = vld [vmem:[%s4] sm:$0x1]
          %v717 = vperm.slane %v715, 0
          %v719 = vadd.f32 %v707, %v717
          %v720 = vadd.f32 %v708, %v717
          %v721 = vadd.f32 %v709, %v717
          %v722 = vadd.f32 %v710, %v717
          %v723 = vadd.f32 %v711, %v717
          %v724 = vadd.f32 %v712, %v717
          %v725 = vadd.f32 %v713, %v717
          %v726 = vadd.f32 %v714, %v717
          %s727 = smul.u32 %s28, 64
          %v728 = vlaneseq
          %v729 = vshrl.u32 %v728, 7
          %v730 = vadd.s32 %v729, 8
          %v731 = vadd.s32 %v729, 16
          %v732 = vadd.s32 %v729, 24
          %v733 = vadd.s32 %v729, 32
          %v734 = vadd.s32 %v729, 40
          %v735 = vadd.s32 %v729, 48
          %v736 = vadd.s32 %v729, 56
          %v737 = vstv %s727
          %v738 = vadd.s32 %v737, %v729
          %v739 = vadd.s32 %v737, %v730
          %v740 = vadd.s32 %v737, %v731
          %v741 = vadd.s32 %v737, %v732
          %v742 = vadd.s32 %v737, %v733
          %v743 = vadd.s32 %v737, %v734
          %v744 = vadd.s32 %v737, %v735
          %v745 = vadd.s32 %v737, %v736
          %vm746 = vcmp.lt.s32.totalorder %v738, 32
          %vm747 = vcmp.lt.s32.totalorder %v739, 32
          %vm748 = vcmp.lt.s32.totalorder %v740, 32
          %vm749 = vcmp.lt.s32.totalorder %v741, 32
          %vm750 = vcmp.lt.s32.totalorder %v742, 32
          %vm751 = vcmp.lt.s32.totalorder %v743, 32
          %vm752 = vcmp.lt.s32.totalorder %v744, 32
          %vm753 = vcmp.lt.s32.totalorder %v745, 32
          %v754 = vsel %vm746, %v719, 0.0
          %v755 = vsel %vm747, %v720, 0.0
          %v756 = vsel %vm748, %v721, 0.0
          %v757 = vsel %vm749, %v722, 0.0
          %v758 = vsel %vm750, %v723, 0.0
          %v759 = vsel %vm751, %v724, 0.0
          %v760 = vsel %vm752, %v725, 0.0
          %v761 = vsel %vm753, %v726, 0.0
          %v762 = vpack.c.bf16 %v755, %v754
          %v763 = vpack.c.bf16 %v757, %v756
          %v764 = vpack.c.bf16 %v759, %v758
          %v765 = vpack.c.bf16 %v761, %v760
          %v766 = vld [vmem:[#allocation8] sm:$0xf]
          %v767 = vld [vmem:[#allocation8 + $0x4] sm:$0xf]
          %v768 = vld [vmem:[#allocation8 + $0x8] sm:$0xf]
          %v769 = vld [vmem:[#allocation8 + $0xc] sm:$0xf]
          %v770 = vld [vmem:[#allocation8 + $0x10] sm:$0xf]
          %v771 = vld [vmem:[#allocation8 + $0x14] sm:$0xf]
          %v772 = vld [vmem:[#allocation8 + $0x18] sm:$0xf]
          %v773 = vld [vmem:[#allocation8 + $0x1c] sm:$0xf]
          %v774 = vld [vmem:[#allocation8 + $0x20] sm:$0xf]
          %v775 = vld [vmem:[#allocation8 + $0x24] sm:$0xf]
          %v776 = vld [vmem:[#allocation8 + $0x28] sm:$0xf]
          %v777 = vld [vmem:[#allocation8 + $0x2c] sm:$0xf]
          %v778 = vld [vmem:[#allocation8 + $0x30] sm:$0xf]
          %v779 = vld [vmem:[#allocation8 + $0x34] sm:$0xf]
          %v780 = vld [vmem:[#allocation8 + $0x38] sm:$0xf]
          %v781 = vld [vmem:[#allocation8 + $0x3c] sm:$0xf]
          %v798 = vunpack.c.l.b16 %v766
          %v799 = vunpack.c.l.b16 %v767
          %v800 = vunpack.c.l.b16 %v768
          %v801 = vunpack.c.l.b16 %v769
          %v802 = vunpack.c.l.b16 %v770
          %v803 = vunpack.c.l.b16 %v771
          %v804 = vunpack.c.l.b16 %v772
          %v805 = vunpack.c.l.b16 %v773
          %v806 = vunpack.c.l.b16 %v774
          %v807 = vunpack.c.l.b16 %v775
          %v808 = vunpack.c.l.b16 %v776
          %v809 = vunpack.c.l.b16 %v777
          %v810 = vunpack.c.l.b16 %v778
          %v811 = vunpack.c.l.b16 %v779
          %v812 = vunpack.c.l.b16 %v780
          %v813 = vunpack.c.l.b16 %v781
          %v814 = vpack.c.b16 %v799, %v798
          %v815 = vpack.c.b16 %v801, %v800
          %v816 = vpack.c.b16 %v803, %v802
          %v817 = vpack.c.b16 %v805, %v804
          %v818 = vpack.c.b16 %v807, %v806
          %v819 = vpack.c.b16 %v809, %v808
          %v820 = vpack.c.b16 %v811, %v810
          %v821 = vpack.c.b16 %v813, %v812
          %830 = vmatpush.bf16.msra.mxu0 %v821
          %831 = vmatpush.bf16.msra.mxu0 %v820
          %832 = vmatpush.bf16.msra.mxu0 %v819
          %833 = vmatpush.bf16.msra.mxu0 %v818
          %834 = vmatpush.bf16.msra.mxu0 %v817
          %835 = vmatpush.bf16.msra.mxu0 %v816
          %836 = vmatpush.bf16.msra.mxu0 %v815
          %837 = vmatpush.bf16.msra.mxu0 %v814
          %838 = vmatmul.bf16.gmra.mxu0 %v762
          %v839 = vpop.f32.mrf.mxu0
          %v840 = vadd.f32 0.0, %v839
          %v841 = vpop.f32.mrf.mxu0
          %v842 = vadd.f32 0.0, %v841
          %843 = vmatmul.bf16.gmra.mxu0 %v763
          %v844 = vpop.f32.mrf.mxu0
          %v845 = vadd.f32 0.0, %v844
          %v846 = vpop.f32.mrf.mxu0
          %v847 = vadd.f32 0.0, %v846
          %848 = vmatmul.bf16.gmra.mxu0 %v764
          %v849 = vpop.f32.mrf.mxu0
          %v850 = vadd.f32 0.0, %v849
          %v851 = vpop.f32.mrf.mxu0
          %v852 = vadd.f32 0.0, %v851
          %853 = vmatmul.bf16.gmra.mxu0 %v765
          %v854 = vpop.f32.mrf.mxu0
          %v855 = vadd.f32 0.0, %v854
          %v856 = vpop.f32.mrf.mxu0
          %v857 = vadd.f32 0.0, %v856
          %858 = vdwg.mxu0
          %v859 = vpack.c.bf16 %v840, %v840
          %v860 = vpack.c.bf16 %v842, %v842
          %v861 = vpack.c.bf16 %v845, %v845
          %v862 = vpack.c.bf16 %v847, %v847
          %v863 = vpack.c.bf16 %v850, %v850
          %v864 = vpack.c.bf16 %v852, %v852
          %v865 = vpack.c.bf16 %v855, %v855
          %v866 = vpack.c.bf16 %v857, %v857
          %867 = vst [vmem:[%s319] sm:$0xf] %v859
          %868 = vst [vmem:[%s319 + $0x4] sm:$0xf] %v860
          %869 = vst [vmem:[%s319 + $0x8] sm:$0xf] %v861
          %870 = vst [vmem:[%s319 + $0xc] sm:$0xf] %v862
          %871 = vst [vmem:[%s319 + $0x10] sm:$0xf] %v863
          %872 = vst [vmem:[%s319 + $0x14] sm:$0xf] %v864
          %873 = vst [vmem:[%s319 + $0x18] sm:$0xf] %v865
          %874 = vst [vmem:[%s319 + $0x1c] sm:$0xf] %v866
        $region64: #{tpu_custom_call.1} parent=43 // pred_fallthru
          _
        %s875 = sand.u32 %s177, 1
        %s876 = scalar_lea.sflag [#allocation5], %s875
        %s877 = sand.u32 %s177, 1
        %s878 = smul.addr %s877, 32
        %s879 = scalar_lea.vmem [#allocation9], %s878
        // Predicated region
        $region65: #{tpu_custom_call.1} parent=43 // pred_check
          %p880 = pneg %p187
        $region66: #{tpu_custom_call.1} parent=43 // pred_check_branch
          %882 = sbr.rel (%p880) target = $region68
        $region67: #{tpu_custom_call.1} parent=43 // pred_region
          %s883 = smul.u32 8, %s28
          %885 = vsyncadd %s876, 0
          %s886 = smul.addr %s883, 4
          %s887 = scalar_lea.hbm %s6, %s886
          %s888 = sshll.u32 %s879, 4
          %s889 = int_to_ptr.vmem [resolvable:$true] %s888
          %s890 = sshll.u32 %s887, 4
          %s891 = int_to_ptr.hbm [resolvable:$true] %s890
          %896 = dma.vmem_to_hbm [thread:$0]  %s889, 512, %s891, %s876, 64, 64, 4
        $region68: #{tpu_custom_call.1} parent=43 // pred_fallthru
          _
      $region44: #{tpu_custom_call.1} parent=5 // pred_fallthru
        _
      %p897 = scmp.le.s32.totalorder 2, %s19
      // Predicated region
      $region69: #{tpu_custom_call.1} parent=5 // pred_check
        %p898 = pneg %p897
      $region70: #{tpu_custom_call.1} parent=5 // pred_check_branch
        %900 = sbr.rel (%p898) target = $region72
      $region71: #{tpu_custom_call.1} parent=5 // pred_region
        %s901 = ssub.s32 %s19, 2
        // Predicated region
        $region73: #{tpu_custom_call.1} parent=71 // pred_check
          %p902 = pneg %p193
        $region74: #{tpu_custom_call.1} parent=71 // pred_check_branch
          %904 = sbr.rel (%p902) target = $region76
        $region75: #{tpu_custom_call.1} parent=71 // pred_region
          %s905 = sand.u32 %s178, 1
          %s906 = scalar_lea.sflag [#allocation5], %s905
          %s907 = sand.u32 %s178, 1
          %s908 = smul.addr %s907, 32
          %s909 = scalar_lea.vmem [#allocation9], %s908
          %911 = dma.done %s906, 512
        $region76: #{tpu_custom_call.1} parent=71 // pred_fallthru
          _
      $region72: #{tpu_custom_call.1} parent=5 // pred_fallthru
        _
    $region6: #{tpu_custom_call.1} parent=1 // loop_footer
      %s23 = sadd.s32 1, %s19
    $region7: #{tpu_custom_call.1} parent=1 // loop_footer_branch
      %18 = sbr.rel target = $region3
    $region8: #{tpu_custom_call.1} parent=1 // loop_exit
      _
    %912 = vsyncpa [#allocation4], 1
    %s913 = scalar_lea.sflag [#allocation4], 1
    %914 = vsyncpa %s913, 1
    %915 = vsyncpa [#allocation7], 1
    %916 = vsyncpa [#allocation5], 1
    %s917 = scalar_lea.sflag [#allocation5], 1
    %918 = vsyncpa %s917, 1

</llo_original>
